<compile_context>
chip_gen: v7x
topology: tpu7x:2x2x1
jax: 0.10.0
libtpu: 0.0.40
codegen_flags: <defaults>
</compile_context>

<pallas_src>
import jax
import jax.numpy as jnp
from jax.experimental import pallas as pl
from jax.experimental.pallas import tpu as pltpu


# ----------------------------- kernels ---------------------------------------


def cpc_encoder_kernel(x_ref, w_ref, b_ref, o_ref):
    # x_ref: (TB, F), w_ref: (F, L), b_ref: (1, L), o_ref: (TB, L)
    y = jnp.dot(x_ref[...], w_ref[...], preferred_element_type=jnp.float32)
    y = y + b_ref[...].astype(jnp.float32)           # broadcast (1, L), f32
    o_ref[...] = jnp.maximum(y, 0.0).astype(o_ref.dtype)


def cpc_fused_kernel(x_ref, w1_ref, b1_ref, w2_ref, b2_ref, lat_ref, pred_ref):
    # Encoder: relu(x @ W1 + b1) -> latent (stored), kept in f32 vregs for layer 2.
    h = jnp.dot(x_ref[...], w1_ref[...], preferred_element_type=jnp.float32)
    h = jnp.maximum(h + b1_ref[...].astype(jnp.float32), 0.0)
    lat_ref[...] = h.astype(lat_ref.dtype)
    # Predictor: relu(latent @ W2 + b2), latent never leaves VMEM.
    p = jnp.dot(h.astype(w2_ref.dtype), w2_ref[...],
                preferred_element_type=jnp.float32)
    p = jnp.maximum(p + b2_ref[...].astype(jnp.float32), 0.0)
    pred_ref[...] = p.astype(pred_ref.dtype)


# ----------------------------- tiling policy ----------------------------------


def _choose_tile_b(B: int) -> int:
    # Tiny/small batches: one block -> zero grid overhead, whole problem in VMEM.
    if B <= 512:
        return B
    # Medium batches: split into >= 2 blocks so both v7x TensorCores get work
    # (harmless on single-TC v5e/v6e). Large batches: cap at 2048 rows so per-step
    # DMA (>= ~1.5 MiB f32) dwarfs the ~0.35 us per-step grid overhead while the
    # double-buffered working set (~3 MiB f32) stays safely under v5e's 16 MiB
    # default scoped VMEM and v7x's 32 MiB scoped / 64 MiB physical VMEM.
    half = -(-B // 2)                       # ceil(B / 2)
    half = ((half + 15) // 16) * 16         # multiple of 16 sublanes (bf16-safe)
    return min(2048, half)


# ----------------------------- wrappers ---------------------------------------


def cpc_forward(x, w, b, *, tile_b=None, out_dtype=None):
    """latent = ReLU(x @ w + b), equivalent to CPC.forward / self.encoder(x)."""
    B, F = x.shape
    Fw, L = w.shape
    assert F == Fw, (F, Fw)
    if tile_b is None:
        tile_b = _choose_tile_b(B)
    if out_dtype is None:
        out_dtype = x.dtype                 # bf16 in -> bf16 out (halves writeback)

    b2d = b.reshape(1, L)
    grid = (pl.cdiv(B, tile_b),)

    itemsize_in = jnp.dtype(x.dtype).itemsize
    itemsize_out = jnp.dtype(out_dtype).itemsize
    cost = pl.CostEstimate(
        flops=2 * B * F * L,
        transcendentals=0,
        bytes_accessed=(B * F * itemsize_in
                        + F * L * jnp.dtype(w.dtype).itemsize
                        + L * jnp.dtype(b.dtype).itemsize
                        + B * L * itemsize_out),
    )

    return pl.pallas_call(
        cpc_encoder_kernel,
        out_shape=jax.ShapeDtypeStruct((B, L), out_dtype),
        grid_spec=pltpu.PrefetchScalarGridSpec(
            num_scalar_prefetch=0,
            grid=grid,
            in_specs=[
                pl.BlockSpec((tile_b, F), lambda i: (i, 0)),   # x tile (streamed)
                pl.BlockSpec((F, L), lambda i: (0, 0)),        # weight (resident)
                pl.BlockSpec((1, L), lambda i: (0, 0)),        # bias (resident)
            ],
            out_specs=pl.BlockSpec((tile_b, L), lambda i: (i, 0)),
        ),
        compiler_params=pltpu.CompilerParams(
            dimension_semantics=("parallel",),   # shards batch tiles across TCs (v7x)
        ),
        cost_estimate=cost,
    )(x, w, b2d)


def cpc_forward_fused(x, w1, b1, w2, b2, *, tile_b=None, out_dtype=None):
    """(latent, predicted) = (ReLU(x@W1+b1), ReLU(latent@W2+b2)) in one kernel.

    Fuses encoder + predictor so the latent never round-trips HBM between the two
    Linear+ReLU layers (use when compute_cpc_loss follows forward()).
    """
    B, F = x.shape
    Fw, L = w1.shape
    L2a, L2b = w2.shape
    assert F == Fw and L == L2a and L == L2b, (F, Fw, L, L2a, L2b)
    if tile_b is None:
        tile_b = _choose_tile_b(B)
    if out_dtype is None:
        out_dtype = x.dtype

    b1_2d = b1.reshape(1, L)
    b2_2d = b2.reshape(1, L)
    grid = (pl.cdiv(B, tile_b),)

    itemsize_in = jnp.dtype(x.dtype).itemsize
    itemsize_out = jnp.dtype(out_dtype).itemsize
    cost = pl.CostEstimate(
        flops=2 * B * F * L + 2 * B * L * L,
        transcendentals=0,
        bytes_accessed=(B * F * itemsize_in
                        + (F * L + L * L) * jnp.dtype(w1.dtype).itemsize
                        + 2 * L * jnp.dtype(b1.dtype).itemsize
                        + 2 * B * L * itemsize_out),
    )

    return pl.pallas_call(
        cpc_fused_kernel,
        out_shape=(jax.ShapeDtypeStruct((B, L), out_dtype),
                   jax.ShapeDtypeStruct((B, L), out_dtype)),
        grid_spec=pltpu.PrefetchScalarGridSpec(
            num_scalar_prefetch=0,
            grid=grid,
            in_specs=[
                pl.BlockSpec((tile_b, F), lambda i: (i, 0)),   # x tile (streamed)
                pl.BlockSpec((F, L), lambda i: (0, 0)),        # W1 (resident)
                pl.BlockSpec((1, L), lambda i: (0, 0)),        # b1 (resident)
                pl.BlockSpec((L, L), lambda i: (0, 0)),        # W2 (resident)
                pl.BlockSpec((1, L), lambda i: (0, 0)),        # b2 (resident)
            ],
            out_specs=[pl.BlockSpec((tile_b, L), lambda i: (i, 0)),
                       pl.BlockSpec((tile_b, L), lambda i: (i, 0))],
        ),
        compiler_params=pltpu.CompilerParams(
            dimension_semantics=("parallel",),
        ),
        cost_estimate=cost,
    )(x, w1, b1_2d, w2, b2_2d)


# ----------------------------- references -------------------------------------


def reference_forward(x, w, b):
    xf = x.astype(jnp.float32)
    wf = w.astype(jnp.float32)
    bf = b.astype(jnp.float32)
    return jnp.maximum(xf @ wf + bf[None, :], 0.0)


# ----------------------------- tests -------------------------------------------


if __name__ == "__main__":
    feature_dim = 64
    latent_dim = 128

    key = jax.random.PRNGKey(0)
    kx, kw1, kb1, kw2, kb2, kx2 = jax.random.split(key, 6)

    # Deterministic synthetic parameters (PyTorch-Linear-like uniform init range).
    bound1 = 1.0 / jnp.sqrt(jnp.float32(feature_dim))
    bound2 = 1.0 / jnp.sqrt(jnp.float32(latent_dim))
    w1 = jax.random.uniform(kw1, (feature_dim, latent_dim), jnp.float32, -bound1, bound1)
    b1 = jax.random.uniform(kb1, (latent_dim,), jnp.float32, -bound1, bound1)
    w2 = jax.random.uniform(kw2, (latent_dim, latent_dim), jnp.float32, -bound2, bound2)
    b2 = jax.random.uniform(kb2, (latent_dim,), jnp.float32, -bound2, bound2)

    # --- Case 1: small batch (single block, no grid overhead), f32 encoder ---
    batch = 8
    x = jax.random.normal(kx, (batch, feature_dim), jnp.float32)
    latent = jax.block_until_ready(cpc_forward(x, w1, b1))
    ref = reference_forward(x, w1, b1)
    assert latent.shape == (batch, latent_dim)
    assert jnp.allclose(latent, ref, atol=1e-5, rtol=1e-5)

    # --- Case 2: medium batch -> >= 2 grid blocks (both v7x TCs busy), f32 ---
    big_batch = 1280
    x_big = jax.random.normal(kx2, (big_batch, feature_dim), jnp.float32)
    latent_big = jax.block_until_ready(cpc_forward(x_big, w1, b1))
    ref_big = reference_forward(x_big, w1, b1)
    assert latent_big.shape == (big_batch, latent_dim)
    assert jnp.allclose(latent_big, ref_big, atol=1e-5, rtol=1e-5)

    # --- Case 3: bf16 activation stream (halves HBM traffic), f32 accumulation ---
    x_bf = x_big.astype(jnp.bfloat16)
    w1_bf = w1.astype(jnp.bfloat16)
    b1_bf = b1.astype(jnp.bfloat16)
    latent_bf = jax.block_until_ready(cpc_forward(x_bf, w1_bf, b1_bf))
    ref_bf = reference_forward(x_bf, w1_bf, b1_bf)
    assert latent_bf.dtype == jnp.bfloat16
    assert jnp.allclose(latent_bf.astype(jnp.float32), ref_bf, atol=5e-2, rtol=5e-2)

    # --- Case 4: fused encoder + predictor (latent never round-trips HBM), f32 ---
    latent_f, pred_f = jax.block_until_ready(
        cpc_forward_fused(x_big, w1, b1, w2, b2)
    )
    ref_lat = reference_forward(x_big, w1, b1)
    ref_pred = jnp.maximum(ref_lat @ w2 + b2[None, :], 0.0)
    assert jnp.allclose(latent_f, ref_lat, atol=1e-5, rtol=1e-5)
    assert jnp.allclose(pred_f, ref_pred, atol=1e-5, rtol=1e-5)

    # TODO(synk): the MSE reduction of compute_cpc_loss (vs future_features) is left
    # to XLA; it could also be folded into cpc_forward_fused as an SMEM scalar output
    # if the loss is always consumed immediately.
    print("KERNEL_OK")
</pallas_src>

<mosaic_0001>
module attributes {stable_mosaic.version = 11 : i64} {
  func.func @cpc_encoder_kernel(%arg0: i32, %arg1: memref<8x64xf32, #tpu.memory_space<vmem>>, %arg2: memref<64x128xf32, #tpu.memory_space<vmem>>, %arg3: memref<1x128xf32, #tpu.memory_space<vmem>>, %arg4: memref<8x128xf32, #tpu.memory_space<vmem>>) attributes {dimension_semantics = [#tpu.dimension_semantics<parallel>], iteration_bounds = array<i64: 1>, scalar_prefetch = 0 : i64, scratch_operands = 0 : i64, tpu.core_type = #tpu.core_type<tc>, window_params = [{transform_indices = @transform_0, window_bounds = array<i64: 8, 64>}, {pipeline_mode = #tpu.pipeline_mode<synchronous>, transform_indices = @transform_1, window_bounds = array<i64: 64, 128>}, {pipeline_mode = #tpu.pipeline_mode<synchronous>, transform_indices = @transform_2, window_bounds = array<i64: 1, 128>}, {transform_indices = @transform_3, window_bounds = array<i64: 8, 128>}]} {
    %c0 = arith.constant 0 : index
    %c0_0 = arith.constant 0 : index
    %0 = vector.load %arg1[%c0, %c0_0] : memref<8x64xf32, #tpu.memory_space<vmem>>, vector<8x64xf32>
    %c0_1 = arith.constant 0 : index
    %c0_2 = arith.constant 0 : index
    %1 = vector.load %arg2[%c0_1, %c0_2] : memref<64x128xf32, #tpu.memory_space<vmem>>, vector<64x128xf32>
    %cst = arith.constant dense<0.000000e+00> : vector<8x128xf32>
    %2 = tpu.matmul %0, %1, %cst {dimension_numbers = #tpu.dot_dimension_numbers<[1], [0], [0], [1], [0, 0, 1, 1], [], []>} : vector<8x64xf32>, vector<64x128xf32>, vector<8x128xf32> -> vector<8x128xf32>
    %c0_3 = arith.constant 0 : index
    %c0_4 = arith.constant 0 : index
    %3 = vector.load %arg3[%c0_3, %c0_4] : memref<1x128xf32, #tpu.memory_space<vmem>>, vector<1x128xf32>
    %4 = vector.broadcast %3 : vector<1x128xf32> to vector<8x128xf32>
    %5 = arith.addf %2, %4 : vector<8x128xf32>
    %cst_5 = arith.constant 0.000000e+00 : f32
    %6 = vector.broadcast %cst_5 : f32 to vector<8x128xf32>
    %7 = arith.maximumf %5, %6 : vector<8x128xf32>
    %c0_6 = arith.constant 0 : index
    %c0_7 = arith.constant 0 : index
    %8 = vector.load %arg4[%c0_6, %c0_7] : memref<8x128xf32, #tpu.memory_space<vmem>>, vector<8x128xf32>
    tpu.vector_store %arg4[%c0_6, %c0_7], %7 {strides = array<i32>} : memref<8x128xf32, #tpu.memory_space<vmem>>, vector<8x128xf32>,
    return
  }
  func.func @transform_0(%arg0: i32) -> (i32, i32) {
    %c0_i32 = arith.constant 0 : i32
    %c0_i32_0 = arith.constant 0 : i32
    return %arg0, %c0_i32 : i32, i32
  }
  func.func @transform_1(%arg0: i32) -> (i32, i32) {
    %c0_i32 = arith.constant 0 : i32
    %c0_i32_0 = arith.constant 0 : i32
    %c0_i32_1 = arith.constant 0 : i32
    return %c0_i32, %c0_i32_0 : i32, i32
  }
  func.func @transform_2(%arg0: i32) -> (i32, i32) {
    %c0_i32 = arith.constant 0 : i32
    %c0_i32_0 = arith.constant 0 : i32
    %c0_i32_1 = arith.constant 0 : i32
    return %c0_i32, %c0_i32_0 : i32, i32
  }
  func.func @transform_3(%arg0: i32) -> (i32, i32) {
    %c0_i32 = arith.constant 0 : i32
    %c0_i32_0 = arith.constant 0 : i32
    return %arg0, %c0_i32 : i32, i32
  }
}

</mosaic_0001>

<llo_original>
// kernel: tpu_custom_call.1
$region0: #{tpu_custom_call.1}
  #allocation0 [shape = 'u32[]', space=smem, size = 0x4, offset = 0x4, fixed_abs, tag = 'smem constant byte address 0x4 - core index']
  #allocation1 [shape = 'u32[144,128]{1,0:T(1,128)}', space=vmem, size = 0x12000, scoped, tag = 'internal scratch']
  %s0 = inlined_call_operand.hbm [shape: f32[8,64], index: 0, kind: input, shape index: {}]
  %s1 = inlined_call_operand.hbm [shape: f32[64,128], index: 1, kind: input, shape index: {}]
  %s2 = inlined_call_operand.vmem [shape: f32[1,128], index: 2, kind: input, shape index: {}]
  %s3 = inlined_call_operand.hbm [shape: f32[8,128], index: 3, kind: output, shape index: {}]
  %s4 = sld [smem:[#allocation0]]
  $region30: #{tpu_custom_call.1} parent=0
    _
  %s6 = ssub.s32 1, %s4
  %s7 = scalar_select 0, %s6, %s4
  $region1: #{tpu_custom_call.1} parent=0
    #allocation2 [shape = 'u8[4096]{0}', space=vmem, size = 0x1000, scoped, tag = 'input window, operand 0, single buffered']
    #allocation3 [shape = 's32[1]{0}', space=sflag, size = 0x4, scoped, tag = 'scoped memory for tpu_custom_call.1']
    #allocation4 [shape = 's32[1]{0}', space=sflag, size = 0x4, scoped, tag = 'scoped memory for tpu_custom_call.1']
    #allocation5 [shape = 'u8[32768]{0}', space=vmem, size = 0x8000, scoped, tag = 'input window, operand 1, single buffered']
    #allocation6 [shape = 's32[1]{0}', space=sflag, size = 0x4, scoped, tag = 'scoped memory for tpu_custom_call.1']
    #allocation7 [shape = 'u8[4096]{0}', space=vmem, size = 0x1000, scoped, tag = 'output window, operand 0, single buffered']
    %8 = vsyncpa [#allocation3], 0
    %9 = vsyncpa [#allocation6], 0
    %10 = vsyncpa [#allocation4], 0
    // Predicated region
    $region2: #{tpu_custom_call.1} parent=1 // pred_check
      _
    $region3: #{tpu_custom_call.1} parent=1 // pred_check_branch
      %12 = sbr.rel (0) target = $region5
    $region4: #{tpu_custom_call.1} parent=1 // pred_region
      %s14 = ssub.s32 128, 128
      %15 = vsyncadd [#allocation3], %s14
      %s17 = sshll.u32 [#allocation2], 4
      %s18 = int_to_ptr.vmem [resolvable:$true] %s17
      %20 = dma.hbm_to_vmem [thread:$0]  %s0, 128, %s18, [#allocation3]
    $region5: #{tpu_custom_call.1} parent=1 // pred_fallthru
      _
    // Predicated region
    $region6: #{tpu_custom_call.1} parent=1 // pred_check
      _
    $region7: #{tpu_custom_call.1} parent=1 // pred_check_branch
      %22 = sbr.rel (0) target = $region9
    $region8: #{tpu_custom_call.1} parent=1 // pred_region
      %s24 = ssub.s32 1024, 1024
      %25 = vsyncadd [#allocation6], %s24
      %s26 = sshll.u32 [#allocation5], 4
      %s27 = int_to_ptr.vmem [resolvable:$true] %s26
      %32 = dma.hbm_to_vmem [thread:$0]  %s1, 1024, %s27, [#allocation6], 128, 128, 8
    $region9: #{tpu_custom_call.1} parent=1 // pred_fallthru
      _
    // Predicated region
    $region10: #{tpu_custom_call.1} parent=1 // pred_check
      _
    $region11: #{tpu_custom_call.1} parent=1 // pred_check_branch
      %34 = sbr.rel (0) target = $region13
    $region12: #{tpu_custom_call.1} parent=1 // pred_region
      _
    $region13: #{tpu_custom_call.1} parent=1 // pred_fallthru
      _
    // Predicated region
    $region14: #{tpu_custom_call.1} parent=1 // pred_check
      _
    $region15: #{tpu_custom_call.1} parent=1 // pred_check_branch
      %36 = sbr.rel (0) target = $region17
    $region16: #{tpu_custom_call.1} parent=1 // pred_region
      %37 = dma.done [#allocation3], 128
    $region17: #{tpu_custom_call.1} parent=1 // pred_fallthru
      _
    // Predicated region
    $region18: #{tpu_custom_call.1} parent=1 // pred_check
      _
    $region19: #{tpu_custom_call.1} parent=1 // pred_check_branch
      %39 = sbr.rel (0) target = $region21
    $region20: #{tpu_custom_call.1} parent=1 // pred_region
      %40 = dma.done [#allocation6], 1024
    $region21: #{tpu_custom_call.1} parent=1 // pred_fallthru
      _
    %v41 = vld [vmem:[#allocation2] sm:$0xff]
    %v42 = vld [vmem:[#allocation5] sm:$0xff]
    %v43 = vld [vmem:[#allocation5 + $0x8] sm:$0xff]
    %v44 = vld [vmem:[#allocation5 + $0x10] sm:$0xff]
    %v45 = vld [vmem:[#allocation5 + $0x18] sm:$0xff]
    %v46 = vld [vmem:[#allocation5 + $0x20] sm:$0xff]
    %v47 = vld [vmem:[#allocation5 + $0x28] sm:$0xff]
    %v48 = vld [vmem:[#allocation5 + $0x30] sm:$0xff]
    %v49 = vld [vmem:[#allocation5 + $0x38] sm:$0xff]
    %v50 = vld [vmem:[%s2] sm:$0x1]
    %v52 = vlaneseq
    %v53 = vshrl.u32 %v52, 7
    %v54 = vsub.s32 0, %v53
    %v55 = vrot.slane %v50, %v54
    %vm57 = vcmask 523264
    %v59 = vsel %vm57, %v41, 0
    %61 = vmatprep.subr.mxu0 0.0
    %62 = vmatpush1.msra.mxu0 %v42
    %63 = vmatprep.subr.mxu0 0.0
    %64 = vmatpush1.msra.mxu0 %v43
    %65 = vmatprep.subr.mxu0 0.0
    %66 = vmatpush1.msra.mxu0 %v44
    %67 = vmatprep.subr.mxu0 0.0
    %68 = vmatpush1.msra.mxu0 %v45
    %69 = vmatprep.subr.mxu0 0.0
    %70 = vmatpush1.msra.mxu0 %v46
    %71 = vmatprep.subr.mxu0 0.0
    %72 = vmatpush1.msra.mxu0 %v47
    %73 = vmatprep.subr.mxu0 0.0
    %74 = vmatpush1.msra.mxu0 %v48
    %75 = vmatprep.subr.mxu0 0.0
    %76 = vmatpush1.msra.mxu0 %v49
    %77 = vmatprep.subr.mxu0 0.0
    %78 = vmatpush1.msra.mxu0 0.0
    %79 = vmatprep.subr.mxu0 0.0
    %80 = vmatpush1.msra.mxu0 0.0
    %81 = vmatprep.subr.mxu0 0.0
    %82 = vmatpush1.msra.mxu0 0.0
    %83 = vmatprep.subr.mxu0 0.0
    %84 = vmatpush1.msra.mxu0 0.0
    %85 = vmatprep.subr.mxu0 0.0
    %86 = vmatpush1.msra.mxu0 0.0
    %87 = vmatprep.subr.mxu0 0.0
    %88 = vmatpush1.msra.mxu0 0.0
    %89 = vmatprep.subr.mxu0 0.0
    %90 = vmatpush1.msra.mxu0 0.0
    %91 = vmatprep.subr.mxu0 0.0
    %92 = vmatpush1.msra.mxu0 0.0
    %93 = vmatprep.subr.mxu0 0.0
    %94 = vmatpush1.msra.mxu0 0.0
    %95 = vmatprep.subr.mxu0 0.0
    %96 = vmatpush1.msra.mxu0 0.0
    %97 = vmatprep.subr.mxu0 0.0
    %98 = vmatpush1.msra.mxu0 0.0
    %99 = vmatprep.subr.mxu0 0.0
    %100 = vmatpush1.msra.mxu0 0.0
    %101 = vmatprep.subr.mxu0 0.0
    %102 = vmatpush1.msra.mxu0 0.0
    %103 = vmatprep.subr.mxu0 0.0
    %104 = vmatpush1.msra.mxu0 0.0
    %105 = vmatprep.subr.mxu0 0.0
    %106 = vmatpush1.msra.mxu0 0.0
    %107 = vmatprep.subr.mxu0 0.0
    %108 = vmatpush1.msra.mxu0 0.0
    %109 = vmatprep.subr.mxu0 0.0
    %110 = vmatpush1.msra.mxu0 0.0
    %111 = vmatprep.subr.mxu0 0.0
    %112 = vmatpush1.msra.mxu0 0.0
    %113 = vmatprep.subr.mxu0 0.0
    %114 = vmatpush1.msra.mxu0 0.0
    %115 = vmatprep.subr.mxu0 0.0
    %116 = vmatpush1.msra.mxu0 0.0
    %117 = vmatprep.subr.mxu0 0.0
    %118 = vmatpush1.msra.mxu0 0.0
    %119 = vmatprep.subr.mxu0 0.0
    %120 = vmatpush1.msra.mxu0 0.0
    %121 = vmatprep.subr.mxu0 0.0
    %122 = vmatpush1.msra.mxu0 0.0
    %123 = vmatprep.subr.mxu0 0.0
    %124 = vmatpush1.msra.mxu0 0.0
    %125 = vmatprep.mubr.f32.mxu0 0.0
    %126 = vmatmul.mubr.f32.gmra.mrb[0].mxu0 %v59
    %v127 = vpop.f32.mrb[0].mxu0
    %v128 = vadd.f32 %v55, %v127
    %v129 = vpop.f32.mrb[0].mxu0
    %130 = vdwg.mxu0
    %v131 = vmax.f32 %v128, 0.0
    %132 = vst [vmem:[#allocation7] sm:$0xff] %v131
    // Predicated region
    $region22: #{tpu_custom_call.1} parent=1 // pred_check
      _
    $region23: #{tpu_custom_call.1} parent=1 // pred_check_branch
      %134 = sbr.rel (0) target = $region25
    $region24: #{tpu_custom_call.1} parent=1 // pred_region
      %s136 = ssub.s32 128, 128
      %137 = vsyncadd [#allocation4], %s136
      %s139 = sshll.u32 [#allocation7], 4
      %s140 = int_to_ptr.vmem [resolvable:$true] %s139
      %142 = dma.vmem_to_hbm [thread:$0]  %s140, 128, %s3, [#allocation4]
    $region25: #{tpu_custom_call.1} parent=1 // pred_fallthru
      _
    // Predicated region
    $region26: #{tpu_custom_call.1} parent=1 // pred_check
      _
    $region27: #{tpu_custom_call.1} parent=1 // pred_check_branch
      %144 = sbr.rel (0) target = $region29
    $region28: #{tpu_custom_call.1} parent=1 // pred_region
      %145 = dma.done [#allocation4], 128
    $region29: #{tpu_custom_call.1} parent=1 // pred_fallthru
      _
    %146 = vsyncpa [#allocation3], 1
    %147 = vsyncpa [#allocation6], 1
    %148 = vsyncpa [#allocation4], 1

</llo_original>
